<compile_context>
chip_gen: v7x
topology: tpu7x:2x2x1
jax: 0.10.0
libtpu: 0.0.40
codegen_flags: <defaults>
</compile_context>

<pallas_src>
import functools

import jax
import jax.numpy as jnp
from jax.experimental import pallas as pl
from jax.experimental.pallas import tpu as pltpu


def _round_up(n, m):
    return ((n + m - 1) // m) * m


def _cdiv(a, b):
    return -(-a // b)


def _vmem_capacity_bytes():
    """Per-TensorCore VMEM capacity; conservative 64 MiB fallback (v7x)."""
    try:
        cap = getattr(pltpu.get_tpu_info(), "vmem_capacity_bytes", None)
        if cap:
            return int(cap)
    except Exception:
        pass
    return 64 * 1024 * 1024


# ---------------------------------------------------------------------------
# Kernels
# ---------------------------------------------------------------------------

def _dpp_fused_kernel(x_ref, w_ref, b_ref, out_ref, *, p):
    """Gate already folded into the wide matmul.

    x_ref : [TB, K]       batch tile (streamed, compute dtype)
    w_ref : [K, 3*p]      resident fused weights [wa | wb | W_g_eff]
    b_ref : [1, 3*p]      resident fused bias row (f32)
    out_ref: [TB, p]
    """
    y = jnp.dot(x_ref[...], w_ref[...],
                preferred_element_type=jnp.float32) + b_ref[...]
    z_a = y[:, 0 * p:1 * p]
    z_b = y[:, 1 * p:2 * p]
    g = y[:, 2 * p:3 * p]
    alpha = jax.nn.sigmoid(g)                    # EUP
    out = z_b + alpha * (z_a - z_b)              # = alpha*z_a + (1-alpha)*z_b
    out_ref[...] = out.astype(out_ref.dtype)


def _dpp_split_kernel(x_ref, w_ref, b_ref, wgu_ref, bgu_ref, out_ref, *, p):
    """Low-rank gate kept un-fused: tiny second matmul done in-kernel.

    w_ref  : [K, 2*p + Gp]   resident [wa | wb | w_g_shared.T]
    wgu_ref: [Gp, p]         resident gate-unit weights
    bgu_ref: [1, p]          gate-unit bias (f32)
    """
    y = jnp.dot(x_ref[...], w_ref[...],
                preferred_element_type=jnp.float32) + b_ref[...]
    z_a = y[:, 0 * p:1 * p]
    z_b = y[:, 1 * p:2 * p]
    x_g = y[:, 2 * p:]                           # zero-padded beyond G (exact)
    g = jnp.dot(x_g.astype(wgu_ref.dtype), wgu_ref[...],
                preferred_element_type=jnp.float32) + bgu_ref[...]
    alpha = jax.nn.sigmoid(g)
    out = z_b + alpha * (z_a - z_b)
    out_ref[...] = out.astype(out_ref.dtype)


# ---------------------------------------------------------------------------
# Wrapper
# ---------------------------------------------------------------------------

def dpp_shared_g_forward(x, params, *, tb=1024, compute_dtype=jnp.bfloat16):
    """x: [B, F_in]. params: dict of weights in PyTorch layout (f32)."""
    B, F_in = x.shape
    F_out, _ = params["w_a"].shape
    G = params["w_g_shared"].shape[0]

    out_dtype = x.dtype
    cdt = jnp.dtype(compute_dtype)
    cbytes = cdt.itemsize
    obytes = jnp.dtype(out_dtype).itemsize

    # Lane-dense padded sizes.
    P = _round_up(F_out, 128)        # per-branch output width
    K = _round_up(F_in, 128)         # contraction dim (lane dim of x)
    G_pad = _round_up(G, 128)

    # Fold the two gate linears only when it does not inflate MXU work:
    # folded gate flops ~ B*F_in*F_out  vs  split ~ B*(F_in*G + G*F_out).
    fold_gate = G * (F_in + F_out) >= F_in * F_out

    # --- wrapper-side packing (f32 algebra, then cast to compute dtype) -----
    f32 = jnp.float32
    wa = params["w_a"].astype(f32).T                 # [F_in, F_out]
    wb = params["w_b"].astype(f32).T
    b_a = params["b_a"].astype(f32)
    b_b = params["b_b"].astype(f32)

    def pad_w(w, rows, cols):
        return jnp.pad(w, ((0, rows - w.shape[0]), (0, cols - w.shape[1])))

    def pad_b(b, cols):
        return jnp.pad(b, (0, cols - b.shape[0]))

    if fold_gate:
        # Exact algebra: no nonlinearity between the two gate linears.
        w_g_eff = params["w_g_shared"].astype(f32).T @ params["w_g_unit"].astype(f32).T
        b_g_eff = (params["b_g_shared"].astype(f32) @ params["w_g_unit"].astype(f32).T
                   + params["b_g_unit"].astype(f32))
        w_cat = jnp.concatenate(
            [pad_w(wa, K, P), pad_w(wb, K, P), pad_w(w_g_eff, K, P)], axis=1)
        b_cat = jnp.concatenate(
            [pad_b(b_a, P), pad_b(b_b, P), pad_b(b_g_eff, P)])[None, :]
        gate_operands = ()
        kernel = functools.partial(_dpp_fused_kernel, p=P)
    else:
        w_gs = params["w_g_shared"].astype(f32).T    # [F_in, G]
        w_gu = params["w_g_unit"].astype(f32).T      # [G, F_out]
        w_cat = jnp.concatenate(
            [pad_w(wa, K, P), pad_w(wb, K, P), pad_w(w_gs, K, G_pad)], axis=1)
        b_cat = jnp.concatenate(
            [pad_b(b_a, P), pad_b(b_b, P),
             pad_b(params["b_g_shared"].astype(f32), G_pad)])[None, :]
        gate_operands = (pad_w(w_gu, G_pad, P).astype(cdt),
                         pad_b(params["b_g_unit"].astype(f32), P)[None, :])
        kernel = functools.partial(_dpp_split_kernel, p=P)

    CAT = w_cat.shape[1]
    w_cat = w_cat.astype(cdt)                        # bias rows stay f32

    # --- batch tiling / VMEM budget ------------------------------------------
    resident_bytes = (K * CAT) * cbytes + CAT * 4
    if not fold_gate:
        resident_bytes += G_pad * P * cbytes + P * 4
    vmem_cap = _vmem_capacity_bytes()
    budget = int(vmem_cap * 0.75)
    # Per-batch-row bytes: double-buffered x / out tiles + f32 y intermediate
    # and epilogue temporaries.
    row_bytes = 2 * (K * cbytes + P * obytes) + 4 * (CAT + 2 * P)
    avail = budget - 2 * resident_bytes              # conservative: weights x2
    if avail > 8 * row_bytes:
        tb_cap = max(8, (avail // row_bytes) // 8 * 8)
    else:
        tb_cap = 8
    # TODO(synk): for F_in*F_out too large for a fully resident weight slab
    # (v7x 64 MiB), add a second grid axis over 128-wide output blocks with an
    # interleaved [wa|wb|wg] weight layout instead of shrinking TB.
    tb_eff = max(8, min(tb, tb_cap))

    n_tiles = max(1, _cdiv(B, tb_eff))
    if B >= 16 and n_tiles < 2:
        n_tiles = 2                                  # keep both v7x TCs busy
    TB = _round_up(_cdiv(B, n_tiles), 8)
    B_pad = n_tiles * TB

    x_p = x
    if (B_pad, K) != (B, F_in):
        x_p = jnp.pad(x, ((0, B_pad - B), (0, K - F_in)))
    x_p = x_p.astype(cdt)

    need = TB * row_bytes + 2 * resident_bytes + (4 << 20)
    vmem_limit = int(min(vmem_cap, max(need, 32 << 20)))

    flops = 2 * B_pad * K * CAT + 5 * B_pad * P
    bytes_accessed = (x_p.size * cbytes + (K * CAT) * cbytes + CAT * 4
                      + B_pad * P * obytes)
    if not fold_gate:
        flops += 2 * B_pad * G_pad * P
        bytes_accessed += G_pad * P * cbytes + P * 4
    cost = pl.CostEstimate(flops=flops, transcendentals=B_pad * P,
                           bytes_accessed=bytes_accessed)

    def run(single_buffer_weights):
        res_kwargs = (dict(pipeline_mode=pl.Buffered(1))
                      if single_buffer_weights else {})
        in_specs = [
            pl.BlockSpec((TB, K), lambda i: (i, 0)),                  # streamed x
            pl.BlockSpec((K, CAT), lambda i: (0, 0), **res_kwargs),   # resident W
            pl.BlockSpec((1, CAT), lambda i: (0, 0), **res_kwargs),   # resident b
        ]
        if not fold_gate:
            in_specs += [
                pl.BlockSpec((G_pad, P), lambda i: (0, 0), **res_kwargs),
                pl.BlockSpec((1, P), lambda i: (0, 0), **res_kwargs),
            ]
        return pl.pallas_call(
            kernel,
            out_shape=jax.ShapeDtypeStruct((B_pad, P), out_dtype),
            grid=(n_tiles,),
            in_specs=in_specs,
            out_specs=pl.BlockSpec((TB, P), lambda i: (i, 0)),
            compiler_params=pltpu.CompilerParams(
                dimension_semantics=("parallel",),   # v7x megacore sharding
                vmem_limit_bytes=vmem_limit,
            ),
            cost_estimate=cost,
        )(x_p, w_cat, b_cat, *gate_operands)

    try:
        out_padded = jax.block_until_ready(run(single_buffer_weights=True))
    except Exception:
        # pipeline_mode=pl.Buffered(1) unsupported on this jax build:
        # fall back to default double-buffered resident weights.
        out_padded = run(single_buffer_weights=False)

    if B_pad == B and P == F_out:
        return out_padded                            # no padding -> no extra copy
    return out_padded[:B, :F_out]


# ---------------------------------------------------------------------------
# Synthetic init + reference
# ---------------------------------------------------------------------------

def init_params(key, input_features, output_features, shared_g_dim):
    """Deterministic synthetic init (kaiming-uniform-like scaling)."""
    ks = jax.random.split(key, 8)

    def lin(kw, kb, out_f, in_f):
        bound_w = (6.0 / in_f) ** 0.5 / (1.0 + 5.0) ** 0.5  # kaiming_uniform a=sqrt(5)
        w = jax.random.uniform(kw, (out_f, in_f), jnp.float32, -bound_w, bound_w)
        bound_b = 1.0 / in_f ** 0.5
        b = jax.random.uniform(kb, (out_f,), jnp.float32, -bound_b, bound_b)
        return w, b

    w_a, b_a = lin(ks[0], ks[1], output_features, input_features)
    w_b, b_b = lin(ks[2], ks[3], output_features, input_features)
    w_gs, b_gs = lin(ks[4], ks[5], shared_g_dim, input_features)
    w_gu, b_gu = lin(ks[6], ks[7], output_features, shared_g_dim)
    return {
        "w_a": w_a, "b_a": b_a,
        "w_b": w_b, "b_b": b_b,
        "w_g_shared": w_gs, "b_g_shared": b_gs,
        "w_g_unit": w_gu, "b_g_unit": b_gu,
    }


def reference_forward(x, p):
    z_a = x @ p["w_a"].T + p["b_a"]
    z_b = x @ p["w_b"].T + p["b_b"]
    x_g = x @ p["w_g_shared"].T + p["b_g_shared"]
    g = x_g @ p["w_g_unit"].T + p["b_g_unit"]
    alpha = jax.nn.sigmoid(g)
    return alpha * z_a + (1.0 - alpha) * z_b


if __name__ == "__main__":
    key = jax.random.PRNGKey(0)
    k_x, k_p1, k_p2 = jax.random.split(key, 3)

    B, F_in, F_out = 8, 32, 32
    x = jax.random.normal(k_x, (B, F_in), jnp.float32)

    # Case 1: gate wide enough to fold (G=16 >= F_in*F_out/(F_in+F_out)=16).
    params_fold = init_params(k_p1, F_in, F_out, shared_g_dim=16)
    # Case 2: low-rank gate (G=8) -> split path with the in-kernel gate matmul.
    params_split = init_params(k_p2, F_in, F_out, shared_g_dim=8)

    checks = [
        ("fused/f32", params_fold, jnp.float32, 1e-4, 1e-4),
        ("split/f32", params_split, jnp.float32, 1e-4, 1e-4),
        ("fused/bf16", params_fold, jnp.bfloat16, 5e-2, 5e-2),  # bf16 inputs, f32 acc
        ("split/bf16", params_split, jnp.bfloat16, 5e-2, 5e-2),
    ]
    for name, p, cdt, atol, rtol in checks:
        out = jax.block_until_ready(dpp_shared_g_forward(x, p, compute_dtype=cdt))
        ref = reference_forward(x, p)
        assert out.shape == (B, F_out), f"bad shape: {name}"
        assert jnp.allclose(out, ref, atol=atol, rtol=rtol), f"mismatch vs reference: {name}"

    print("KERNEL_OK")
</pallas_src>

<mosaic_0001>
module attributes {stable_mosaic.version = 11 : i64} {
  func.func @_dpp_fused_kernel(%arg0: i32, %arg1: memref<8x128xf32, #tpu.memory_space<vmem>>, %arg2: memref<128x384xf32, #tpu.memory_space<vmem>>, %arg3: memref<1x384xf32, #tpu.memory_space<vmem>>, %arg4: memref<8x128xf32, #tpu.memory_space<vmem>>) attributes {dimension_semantics = [#tpu.dimension_semantics<parallel>], iteration_bounds = array<i64: 1>, scalar_prefetch = 0 : i64, scratch_operands = 0 : i64, tpu.core_type = #tpu.core_type<tc>, window_params = [{transform_indices = @transform_0, window_bounds = array<i64: 8, 128>}, {pipeline_mode = #tpu.pipeline_mode<synchronous>, transform_indices = @transform_1, window_bounds = array<i64: 128, 384>}, {pipeline_mode = #tpu.pipeline_mode<synchronous>, transform_indices = @transform_2, window_bounds = array<i64: 1, 384>}, {transform_indices = @transform_3, window_bounds = array<i64: 8, 128>}]} {
    %c0 = arith.constant 0 : index
    %c0_0 = arith.constant 0 : index
    %0 = vector.load %arg1[%c0, %c0_0] : memref<8x128xf32, #tpu.memory_space<vmem>>, vector<8x128xf32>
    %c0_1 = arith.constant 0 : index
    %c0_2 = arith.constant 0 : index
    %1 = vector.load %arg2[%c0_1, %c0_2] : memref<128x384xf32, #tpu.memory_space<vmem>>, vector<128x384xf32>
    %cst = arith.constant dense<0.000000e+00> : vector<8x384xf32>
    %2 = tpu.matmul %0, %1, %cst {dimension_numbers = #tpu.dot_dimension_numbers<[1], [0], [0], [1], [0, 0, 1, 1], [], []>} : vector<8x128xf32>, vector<128x384xf32>, vector<8x384xf32> -> vector<8x384xf32>
    %c0_3 = arith.constant 0 : index
    %c0_4 = arith.constant 0 : index
    %3 = vector.load %arg3[%c0_3, %c0_4] : memref<1x384xf32, #tpu.memory_space<vmem>>, vector<1x384xf32>
    %4 = vector.broadcast %3 : vector<1x384xf32> to vector<8x384xf32>
    %5 = arith.addf %2, %4 : vector<8x384xf32>
    %6 = vector.extract_strided_slice %5 {offsets = [0, 0], sizes = [8, 128], strides = [1, 1]} : vector<8x384xf32> to vector<8x128xf32>
    %7 = vector.extract_strided_slice %5 {offsets = [0, 128], sizes = [8, 128], strides = [1, 1]} : vector<8x384xf32> to vector<8x128xf32>
    %8 = vector.extract_strided_slice %5 {offsets = [0, 256], sizes = [8, 128], strides = [1, 1]} : vector<8x384xf32> to vector<8x128xf32>
    %9 = arith.negf %8 : vector<8x128xf32>
    %10 = math.exp %9 : vector<8x128xf32>
    %cst_5 = arith.constant 1.000000e+00 : f32
    %11 = vector.broadcast %cst_5 : f32 to vector<8x128xf32>
    %12 = arith.addf %11, %10 : vector<8x128xf32>
    %13 = arith.divf %11, %12 : vector<8x128xf32>
    %14 = arith.subf %6, %7 : vector<8x128xf32>
    %15 = arith.mulf %13, %14 : vector<8x128xf32>
    %16 = arith.addf %7, %15 : vector<8x128xf32>
    %c0_6 = arith.constant 0 : index
    %c0_7 = arith.constant 0 : index
    %17 = vector.load %arg4[%c0_6, %c0_7] : memref<8x128xf32, #tpu.memory_space<vmem>>, vector<8x128xf32>
    tpu.vector_store %arg4[%c0_6, %c0_7], %16 {strides = array<i32>} : memref<8x128xf32, #tpu.memory_space<vmem>>, vector<8x128xf32>,
    return
  }
  func.func @transform_0(%arg0: i32) -> (i32, i32) {
    %c0_i32 = arith.constant 0 : i32
    %c0_i32_0 = arith.constant 0 : i32
    return %arg0, %c0_i32 : i32, i32
  }
  func.func @transform_1(%arg0: i32) -> (i32, i32) {
    %c0_i32 = arith.constant 0 : i32
    %c0_i32_0 = arith.constant 0 : i32
    %c0_i32_1 = arith.constant 0 : i32
    return %c0_i32, %c0_i32_0 : i32, i32
  }
  func.func @transform_2(%arg0: i32) -> (i32, i32) {
    %c0_i32 = arith.constant 0 : i32
    %c0_i32_0 = arith.constant 0 : i32
    %c0_i32_1 = arith.constant 0 : i32
    return %c0_i32, %c0_i32_0 : i32, i32
  }
  func.func @transform_3(%arg0: i32) -> (i32, i32) {
    %c0_i32 = arith.constant 0 : i32
    %c0_i32_0 = arith.constant 0 : i32
    return %arg0, %c0_i32 : i32, i32
  }
}

module attributes {stable_mosaic.version = 11 : i64} {
  func.func @_dpp_fused_kernel(%arg0: i32, %arg1: memref<8x128xf32, #tpu.memory_space<vmem>>, %arg2: memref<128x384xf32, #tpu.memory_space<vmem>>, %arg3: memref<1x384xf32, #tpu.memory_space<vmem>>, %arg4: memref<8x128xf32, #tpu.memory_space<vmem>>) attributes {dimension_semantics = [#tpu.dimension_semantics<parallel>], iteration_bounds = array<i64: 1>, scalar_prefetch = 0 : i64, scratch_operands = 0 : i64, tpu.core_type = #tpu.core_type<tc>, window_params = [{transform_indices = @transform_0, window_bounds = array<i64: 8, 128>}, {pipeline_mode = #tpu.pipeline_mode<synchronous>, transform_indices = @transform_1, window_bounds = array<i64: 128, 384>}, {pipeline_mode = #tpu.pipeline_mode<synchronous>, transform_indices = @transform_2, window_bounds = array<i64: 1, 384>}, {transform_indices = @transform_3, window_bounds = array<i64: 8, 128>}]} {
    %c0 = arith.constant 0 : index
    %c0_0 = arith.constant 0 : index
    %0 = vector.load %arg1[%c0, %c0_0] : memref<8x128xf32, #tpu.memory_space<vmem>>, vector<8x128xf32>
    %c0_1 = arith.constant 0 : index
    %c0_2 = arith.constant 0 : index
    %1 = vector.load %arg2[%c0_1, %c0_2] : memref<128x384xf32, #tpu.memory_space<vmem>>, vector<128x384xf32>
    %cst = arith.constant dense<0.000000e+00> : vector<8x384xf32>
    %2 = tpu.matmul %0, %1, %cst {dimension_numbers = #tpu.dot_dimension_numbers<[1], [0], [0], [1], [0, 0, 1, 1], [], []>} : vector<8x128xf32>, vector<128x384xf32>, vector<8x384xf32> -> vector<8x384xf32>
    %c0_3 = arith.constant 0 : index
    %c0_4 = arith.constant 0 : index
    %3 = vector.load %arg3[%c0_3, %c0_4] : memref<1x384xf32, #tpu.memory_space<vmem>>, vector<1x384xf32>
    %4 = vector.broadcast %3 : vector<1x384xf32> to vector<8x384xf32>
    %5 = arith.addf %2, %4 : vector<8x384xf32>
    %6 = vector.extract_strided_slice %5 {offsets = [0, 0], sizes = [8, 128], strides = [1, 1]} : vector<8x384xf32> to vector<8x128xf32>
    %7 = vector.extract_strided_slice %5 {offsets = [0, 128], sizes = [8, 128], strides = [1, 1]} : vector<8x384xf32> to vector<8x128xf32>
    %8 = vector.extract_strided_slice %5 {offsets = [0, 256], sizes = [8, 128], strides = [1, 1]} : vector<8x384xf32> to vector<8x128xf32>
    %9 = arith.negf %8 : vector<8x128xf32>
    %10 = math.exp %9 : vector<8x128xf32>
    %cst_5 = arith.constant 1.000000e+00 : f32
    %11 = vector.broadcast %cst_5 : f32 to vector<8x128xf32>
    %12 = arith.addf %11, %10 : vector<8x128xf32>
    %13 = arith.divf %11, %12 : vector<8x128xf32>
    %14 = arith.subf %6, %7 : vector<8x128xf32>
    %15 = arith.mulf %13, %14 : vector<8x128xf32>
    %16 = arith.addf %7, %15 : vector<8x128xf32>
    %c0_6 = arith.constant 0 : index
    %c0_7 = arith.constant 0 : index
    %17 = vector.load %arg4[%c0_6, %c0_7] : memref<8x128xf32, #tpu.memory_space<vmem>>, vector<8x128xf32>
    tpu.vector_store %arg4[%c0_6, %c0_7], %16 {strides = array<i32>} : memref<8x128xf32, #tpu.memory_space<vmem>>, vector<8x128xf32>,
    return
  }
  func.func @transform_0(%arg0: i32) -> (i32, i32) {
    %c0_i32 = arith.constant 0 : i32
    %c0_i32_0 = arith.constant 0 : i32
    return %arg0, %c0_i32 : i32, i32
  }
  func.func @transform_1(%arg0: i32) -> (i32, i32) {
    %c0_i32 = arith.constant 0 : i32
    %c0_i32_0 = arith.constant 0 : i32
    %c0_i32_1 = arith.constant 0 : i32
    return %c0_i32, %c0_i32_0 : i32, i32
  }
  func.func @transform_2(%arg0: i32) -> (i32, i32) {
    %c0_i32 = arith.constant 0 : i32
    %c0_i32_0 = arith.constant 0 : i32
    %c0_i32_1 = arith.constant 0 : i32
    return %c0_i32, %c0_i32_0 : i32, i32
  }
  func.func @transform_3(%arg0: i32) -> (i32, i32) {
    %c0_i32 = arith.constant 0 : i32
    %c0_i32_0 = arith.constant 0 : i32
    return %arg0, %c0_i32 : i32, i32
  }
}

</mosaic_0001>

<llo_original>
// kernel: tpu_custom_call.1
$region0: #{tpu_custom_call.1}
  #allocation0 [shape = 'u32[]', space=smem, size = 0x4, offset = 0x4, fixed_abs, tag = 'smem constant byte address 0x4 - core index']
  #allocation1 [shape = 'u32[144,128]{1,0:T(1,128)}', space=vmem, size = 0x12000, scoped, tag = 'internal scratch']
  %s0 = inlined_call_operand.hbm [shape: f32[8,128], index: 0, kind: input, shape index: {}]
  %s1 = inlined_call_operand.hbm [shape: f32[128,384], index: 1, kind: input, shape index: {}]
  %s2 = inlined_call_operand.vmem [shape: f32[1,384], index: 2, kind: input, shape index: {}]
  %s3 = inlined_call_operand.hbm [shape: f32[8,128], index: 3, kind: output, shape index: {}]
  %s4 = sld [smem:[#allocation0]]
  $region30: #{tpu_custom_call.1} parent=0
    _
  %s6 = ssub.s32 1, %s4
  %s7 = scalar_select 0, %s6, %s4
  $region1: #{tpu_custom_call.1} parent=0
    #allocation2 [shape = 'u8[4096]{0}', space=vmem, size = 0x1000, scoped, tag = 'input window, operand 0, single buffered']
    #allocation3 [shape = 's32[1]{0}', space=sflag, size = 0x4, scoped, tag = 'scoped memory for tpu_custom_call.1']
    #allocation4 [shape = 's32[1]{0}', space=sflag, size = 0x4, scoped, tag = 'scoped memory for tpu_custom_call.1']
    #allocation5 [shape = 'u8[196608]{0}', space=vmem, size = 0x30000, scoped, tag = 'input window, operand 1, single buffered']
    #allocation6 [shape = 's32[1]{0}', space=sflag, size = 0x4, scoped, tag = 'scoped memory for tpu_custom_call.1']
    #allocation7 [shape = 'u8[4096]{0}', space=vmem, size = 0x1000, scoped, tag = 'output window, operand 0, single buffered']
    %8 = vsyncpa [#allocation3], 0
    %9 = vsyncpa [#allocation6], 0
    %10 = vsyncpa [#allocation4], 0
    // Predicated region
    $region2: #{tpu_custom_call.1} parent=1 // pred_check
      _
    $region3: #{tpu_custom_call.1} parent=1 // pred_check_branch
      %12 = sbr.rel (0) target = $region5
    $region4: #{tpu_custom_call.1} parent=1 // pred_region
      %s14 = ssub.s32 128, 128
      %15 = vsyncadd [#allocation3], %s14
      %s17 = sshll.u32 [#allocation2], 4
      %s18 = int_to_ptr.vmem [resolvable:$true] %s17
      %20 = dma.hbm_to_vmem [thread:$0]  %s0, 128, %s18, [#allocation3]
    $region5: #{tpu_custom_call.1} parent=1 // pred_fallthru
      _
    // Predicated region
    $region6: #{tpu_custom_call.1} parent=1 // pred_check
      _
    $region7: #{tpu_custom_call.1} parent=1 // pred_check_branch
      %22 = sbr.rel (0) target = $region9
    $region8: #{tpu_custom_call.1} parent=1 // pred_region
      %s24 = ssub.s32 6144, 6144
      %25 = vsyncadd [#allocation6], %s24
      %s26 = sshll.u32 [#allocation5], 4
      %s27 = int_to_ptr.vmem [resolvable:$true] %s26
      %32 = dma.hbm_to_vmem [thread:$0]  %s1, 6144, %s27, [#allocation6], 384, 384, 24
    $region9: #{tpu_custom_call.1} parent=1 // pred_fallthru
      _
    // Predicated region
    $region10: #{tpu_custom_call.1} parent=1 // pred_check
      _
    $region11: #{tpu_custom_call.1} parent=1 // pred_check_branch
      %34 = sbr.rel (0) target = $region13
    $region12: #{tpu_custom_call.1} parent=1 // pred_region
      _
    $region13: #{tpu_custom_call.1} parent=1 // pred_fallthru
      _
    // Predicated region
    $region14: #{tpu_custom_call.1} parent=1 // pred_check
      _
    $region15: #{tpu_custom_call.1} parent=1 // pred_check_branch
      %36 = sbr.rel (0) target = $region17
    $region16: #{tpu_custom_call.1} parent=1 // pred_region
      %37 = dma.done [#allocation3], 128
    $region17: #{tpu_custom_call.1} parent=1 // pred_fallthru
      _
    // Predicated region
    $region18: #{tpu_custom_call.1} parent=1 // pred_check
      _
    $region19: #{tpu_custom_call.1} parent=1 // pred_check_branch
      %39 = sbr.rel (0) target = $region21
    $region20: #{tpu_custom_call.1} parent=1 // pred_region
      %40 = dma.done [#allocation6], 6144
    $region21: #{tpu_custom_call.1} parent=1 // pred_fallthru
      _
    %v41 = vld [vmem:[#allocation2] sm:$0xff]
    %v42 = vld [vmem:[#allocation5] sm:$0xff]
    %v43 = vld [vmem:[#allocation5 + $0x8] sm:$0xff]
    %v44 = vld [vmem:[#allocation5 + $0x10] sm:$0xff]
    %v45 = vld [vmem:[#allocation5 + $0x18] sm:$0xff]
    %v46 = vld [vmem:[#allocation5 + $0x20] sm:$0xff]
    %v47 = vld [vmem:[#allocation5 + $0x28] sm:$0xff]
    %v48 = vld [vmem:[#allocation5 + $0x30] sm:$0xff]
    %v49 = vld [vmem:[#allocation5 + $0x38] sm:$0xff]
    %v50 = vld [vmem:[#allocation5 + $0x40] sm:$0xff]
    %v51 = vld [vmem:[#allocation5 + $0x48] sm:$0xff]
    %v52 = vld [vmem:[#allocation5 + $0x50] sm:$0xff]
    %v53 = vld [vmem:[#allocation5 + $0x58] sm:$0xff]
    %v54 = vld [vmem:[#allocation5 + $0x60] sm:$0xff]
    %v55 = vld [vmem:[#allocation5 + $0x68] sm:$0xff]
    %v56 = vld [vmem:[#allocation5 + $0x70] sm:$0xff]
    %v57 = vld [vmem:[#allocation5 + $0x78] sm:$0xff]
    %v58 = vld [vmem:[#allocation5 + $0x80] sm:$0xff]
    %v59 = vld [vmem:[#allocation5 + $0x88] sm:$0xff]
    %v60 = vld [vmem:[#allocation5 + $0x90] sm:$0xff]
    %v61 = vld [vmem:[#allocation5 + $0x98] sm:$0xff]
    %v62 = vld [vmem:[#allocation5 + $0xa0] sm:$0xff]
    %v63 = vld [vmem:[#allocation5 + $0xa8] sm:$0xff]
    %v64 = vld [vmem:[#allocation5 + $0xb0] sm:$0xff]
    %v65 = vld [vmem:[#allocation5 + $0xb8] sm:$0xff]
    %v66 = vld [vmem:[#allocation5 + $0xc0] sm:$0xff]
    %v67 = vld [vmem:[#allocation5 + $0xc8] sm:$0xff]
    %v68 = vld [vmem:[#allocation5 + $0xd0] sm:$0xff]
    %v69 = vld [vmem:[#allocation5 + $0xd8] sm:$0xff]
    %v70 = vld [vmem:[#allocation5 + $0xe0] sm:$0xff]
    %v71 = vld [vmem:[#allocation5 + $0xe8] sm:$0xff]
    %v72 = vld [vmem:[#allocation5 + $0xf0] sm:$0xff]
    %v73 = vld [vmem:[#allocation5 + $0xf8] sm:$0xff]
    %v74 = vld [vmem:[#allocation5 + $0x100] sm:$0xff]
    %v75 = vld [vmem:[#allocation5 + $0x108] sm:$0xff]
    %v76 = vld [vmem:[#allocation5 + $0x110] sm:$0xff]
    %v77 = vld [vmem:[#allocation5 + $0x118] sm:$0xff]
    %v78 = vld [vmem:[#allocation5 + $0x120] sm:$0xff]
    %v79 = vld [vmem:[#allocation5 + $0x128] sm:$0xff]
    %v80 = vld [vmem:[#allocation5 + $0x130] sm:$0xff]
    %v81 = vld [vmem:[#allocation5 + $0x138] sm:$0xff]
    %v82 = vld [vmem:[#allocation5 + $0x140] sm:$0xff]
    %v83 = vld [vmem:[#allocation5 + $0x148] sm:$0xff]
    %v84 = vld [vmem:[#allocation5 + $0x150] sm:$0xff]
    %v85 = vld [vmem:[#allocation5 + $0x158] sm:$0xff]
    %v86 = vld [vmem:[#allocation5 + $0x160] sm:$0xff]
    %v87 = vld [vmem:[#allocation5 + $0x168] sm:$0xff]
    %v88 = vld [vmem:[#allocation5 + $0x170] sm:$0xff]
    %v89 = vld [vmem:[#allocation5 + $0x178] sm:$0xff]
    %v90 = vld [vmem:[%s2] sm:$0x7]
    %v92 = vlaneseq
    %v93 = vshrl.u32 %v92, 7
    %v94 = vsub.s32 0, %v93
    %v95 = vrot.slane %v90, %v94
    %v96 = vlaneseq
    %v97 = vshrl.u32 %v96, 7
    %v98 = vsub.s32 1, %v97
    %v99 = vrot.slane %v90, %v98
    %v100 = vlaneseq
    %v101 = vshrl.u32 %v100, 7
    %v102 = vsub.s32 2, %v101
    %v103 = vrot.slane %v90, %v102
    %107 = vmatprep.subr.mxu0 %v43
    %108 = vmatpush1.msra.mxu0 %v42
    %109 = vmatprep.subr.mxu0 %v46
    %110 = vmatpush1.msra.mxu0 %v45
    %111 = vmatprep.subr.mxu0 %v49
    %112 = vmatpush1.msra.mxu0 %v48
    %113 = vmatprep.subr.mxu0 %v52
    %114 = vmatpush1.msra.mxu0 %v51
    %115 = vmatprep.subr.mxu0 %v55
    %116 = vmatpush1.msra.mxu0 %v54
    %117 = vmatprep.subr.mxu0 %v58
    %118 = vmatpush1.msra.mxu0 %v57
    %119 = vmatprep.subr.mxu0 %v61
    %120 = vmatpush1.msra.mxu0 %v60
    %121 = vmatprep.subr.mxu0 %v64
    %122 = vmatpush1.msra.mxu0 %v63
    %123 = vmatprep.subr.mxu0 %v67
    %124 = vmatpush1.msra.mxu0 %v66
    %125 = vmatprep.subr.mxu0 %v70
    %126 = vmatpush1.msra.mxu0 %v69
    %127 = vmatprep.subr.mxu0 %v73
    %128 = vmatpush1.msra.mxu0 %v72
    %129 = vmatprep.subr.mxu0 %v76
    %130 = vmatpush1.msra.mxu0 %v75
    %131 = vmatprep.subr.mxu0 %v79
    %132 = vmatpush1.msra.mxu0 %v78
    %133 = vmatprep.subr.mxu0 %v82
    %134 = vmatpush1.msra.mxu0 %v81
    %135 = vmatprep.subr.mxu0 %v85
    %136 = vmatpush1.msra.mxu0 %v84
    %137 = vmatprep.subr.mxu0 %v88
    %138 = vmatpush1.msra.mxu0 %v87
    %139 = vmatprep.subr.mxu0 0.0
    %140 = vmatpush1.msra.mxu0 0.0
    %141 = vmatprep.subr.mxu0 0.0
    %142 = vmatpush1.msra.mxu0 0.0
    %143 = vmatprep.subr.mxu0 0.0
    %144 = vmatpush1.msra.mxu0 0.0
    %145 = vmatprep.subr.mxu0 0.0
    %146 = vmatpush1.msra.mxu0 0.0
    %147 = vmatprep.subr.mxu0 0.0
    %148 = vmatpush1.msra.mxu0 0.0
    %149 = vmatprep.subr.mxu0 0.0
    %150 = vmatpush1.msra.mxu0 0.0
    %151 = vmatprep.subr.mxu0 0.0
    %152 = vmatpush1.msra.mxu0 0.0
    %153 = vmatprep.subr.mxu0 0.0
    %154 = vmatpush1.msra.mxu0 0.0
    %155 = vmatprep.subr.mxu0 0.0
    %156 = vmatpush1.msra.mxu0 0.0
    %157 = vmatprep.subr.mxu0 0.0
    %158 = vmatpush1.msra.mxu0 0.0
    %159 = vmatprep.subr.mxu0 0.0
    %160 = vmatpush1.msra.mxu0 0.0
    %161 = vmatprep.subr.mxu0 0.0
    %162 = vmatpush1.msra.mxu0 0.0
    %163 = vmatprep.subr.mxu0 0.0
    %164 = vmatpush1.msra.mxu0 0.0
    %165 = vmatprep.subr.mxu0 0.0
    %166 = vmatpush1.msra.mxu0 0.0
    %167 = vmatprep.subr.mxu0 0.0
    %168 = vmatpush1.msra.mxu0 0.0
    %169 = vmatprep.subr.mxu0 0.0
    %170 = vmatpush1.msra.mxu0 0.0
    %171 = vmatprep.mubr.f32.mxu0 0.0
    %172 = vmatmul.mubr.f32.gmra.mrb[0].mxu0 %v41
    %v173 = vpop.f32.mrb[0].mxu0
    %v174 = vadd.f32 %v95, %v173
    %v175 = vpop.f32.mrb[0].mxu0
    %v176 = vadd.f32 %v99, %v175
    %177 = vdwg.mxu0
    %178 = vmatprep.subr.mxu0 0.0
    %179 = vmatpush1.msra.mxu0 %v44
    %180 = vmatprep.subr.mxu0 0.0
    %181 = vmatpush1.msra.mxu0 %v47
    %182 = vmatprep.subr.mxu0 0.0
    %183 = vmatpush1.msra.mxu0 %v50
    %184 = vmatprep.subr.mxu0 0.0
    %185 = vmatpush1.msra.mxu0 %v53
    %186 = vmatprep.subr.mxu0 0.0
    %187 = vmatpush1.msra.mxu0 %v56
    %188 = vmatprep.subr.mxu0 0.0
    %189 = vmatpush1.msra.mxu0 %v59
    %190 = vmatprep.subr.mxu0 0.0
    %191 = vmatpush1.msra.mxu0 %v62
    %192 = vmatprep.subr.mxu0 0.0
    %193 = vmatpush1.msra.mxu0 %v65
    %194 = vmatprep.subr.mxu0 0.0
    %195 = vmatpush1.msra.mxu0 %v68
    %196 = vmatprep.subr.mxu0 0.0
    %197 = vmatpush1.msra.mxu0 %v71
    %198 = vmatprep.subr.mxu0 0.0
    %199 = vmatpush1.msra.mxu0 %v74
    %200 = vmatprep.subr.mxu0 0.0
    %201 = vmatpush1.msra.mxu0 %v77
    %202 = vmatprep.subr.mxu0 0.0
    %203 = vmatpush1.msra.mxu0 %v80
    %204 = vmatprep.subr.mxu0 0.0
    %205 = vmatpush1.msra.mxu0 %v83
    %206 = vmatprep.subr.mxu0 0.0
    %207 = vmatpush1.msra.mxu0 %v86
    %208 = vmatprep.subr.mxu0 0.0
    %209 = vmatpush1.msra.mxu0 %v89
    %210 = vmatprep.subr.mxu0 0.0
    %211 = vmatpush1.msra.mxu0 0.0
    %212 = vmatprep.subr.mxu0 0.0
    %213 = vmatpush1.msra.mxu0 0.0
    %214 = vmatprep.subr.mxu0 0.0
    %215 = vmatpush1.msra.mxu0 0.0
    %216 = vmatprep.subr.mxu0 0.0
    %217 = vmatpush1.msra.mxu0 0.0
    %218 = vmatprep.subr.mxu0 0.0
    %219 = vmatpush1.msra.mxu0 0.0
    %220 = vmatprep.subr.mxu0 0.0
    %221 = vmatpush1.msra.mxu0 0.0
    %222 = vmatprep.subr.mxu0 0.0
    %223 = vmatpush1.msra.mxu0 0.0
    %224 = vmatprep.subr.mxu0 0.0
    %225 = vmatpush1.msra.mxu0 0.0
    %226 = vmatprep.subr.mxu0 0.0
    %227 = vmatpush1.msra.mxu0 0.0
    %228 = vmatprep.subr.mxu0 0.0
    %229 = vmatpush1.msra.mxu0 0.0
    %230 = vmatprep.subr.mxu0 0.0
    %231 = vmatpush1.msra.mxu0 0.0
    %232 = vmatprep.subr.mxu0 0.0
    %233 = vmatpush1.msra.mxu0 0.0
    %234 = vmatprep.subr.mxu0 0.0
    %235 = vmatpush1.msra.mxu0 0.0
    %236 = vmatprep.subr.mxu0 0.0
    %237 = vmatpush1.msra.mxu0 0.0
    %238 = vmatprep.subr.mxu0 0.0
    %239 = vmatpush1.msra.mxu0 0.0
    %240 = vmatprep.subr.mxu0 0.0
    %241 = vmatpush1.msra.mxu0 0.0
    %242 = vmatprep.mubr.f32.mxu0 0.0
    %243 = vmatmul.mubr.f32.gmra.mrb[0].mxu0 %v41
    %v244 = vpop.f32.mrb[0].mxu0
    %v245 = vadd.f32 %v103, %v244
    %v246 = vpop.f32.mrb[0].mxu0
    %247 = vdwg.mxu0
    %v248 = vxor.u32 %v245, 2147483648
    %v249 = vmul.f32 %v248, 1.442695
    %v250 = vpow.pop %v249
    %v251 = vadd.f32 %v250, 1.0
    %v252 = vrcp.pop %v251
    %v253 = vmul.f32 1.0, %v252
    %v254 = vsub.f32 %v174, %v176
    %v255 = vmul.f32 %v253, %v254
    %v256 = vadd.f32 %v176, %v255
    %257 = vst [vmem:[#allocation7] sm:$0xff] %v256
    // Predicated region
    $region22: #{tpu_custom_call.1} parent=1 // pred_check
      _
    $region23: #{tpu_custom_call.1} parent=1 // pred_check_branch
      %259 = sbr.rel (0) target = $region25
    $region24: #{tpu_custom_call.1} parent=1 // pred_region
      %s261 = ssub.s32 128, 128
      %262 = vsyncadd [#allocation4], %s261
      %s264 = sshll.u32 [#allocation7], 4
      %s265 = int_to_ptr.vmem [resolvable:$true] %s264
      %267 = dma.vmem_to_hbm [thread:$0]  %s265, 128, %s3, [#allocation4]
    $region25: #{tpu_custom_call.1} parent=1 // pred_fallthru
      _
    // Predicated region
    $region26: #{tpu_custom_call.1} parent=1 // pred_check
      _
    $region27: #{tpu_custom_call.1} parent=1 // pred_check_branch
      %269 = sbr.rel (0) target = $region29
    $region28: #{tpu_custom_call.1} parent=1 // pred_region
      %270 = dma.done [#allocation4], 128
    $region29: #{tpu_custom_call.1} parent=1 // pred_fallthru
      _
    %271 = vsyncpa [#allocation3], 1
    %272 = vsyncpa [#allocation6], 1
    %273 = vsyncpa [#allocation4], 1

// kernel: tpu_custom_call.1
$region0: #{tpu_custom_call.1}
  #allocation0 [shape = 'u32[]', space=smem, size = 0x4, offset = 0x4, fixed_abs, tag = 'smem constant byte address 0x4 - core index']
  #allocation1 [shape = 'u32[144,128]{1,0:T(1,128)}', space=vmem, size = 0x12000, scoped, tag = 'internal scratch']
  %s0 = inlined_call_operand.hbm [shape: f32[8,128], index: 0, kind: input, shape index: {}]
  %s1 = inlined_call_operand.hbm [shape: f32[128,384], index: 1, kind: input, shape index: {}]
  %s2 = inlined_call_operand.vmem [shape: f32[1,384], index: 2, kind: input, shape index: {}]
  %s3 = inlined_call_operand.hbm [shape: f32[8,128], index: 3, kind: output, shape index: {}]
  %s4 = sld [smem:[#allocation0]]
  $region30: #{tpu_custom_call.1} parent=0
    _
  %s6 = ssub.s32 1, %s4
  %s7 = scalar_select 0, %s6, %s4
  $region1: #{tpu_custom_call.1} parent=0
    #allocation2 [shape = 'u8[4096]{0}', space=vmem, size = 0x1000, scoped, tag = 'input window, operand 0, single buffered']
    #allocation3 [shape = 's32[1]{0}', space=sflag, size = 0x4, scoped, tag = 'scoped memory for tpu_custom_call.1']
    #allocation4 [shape = 's32[1]{0}', space=sflag, size = 0x4, scoped, tag = 'scoped memory for tpu_custom_call.1']
    #allocation5 [shape = 'u8[196608]{0}', space=vmem, size = 0x30000, scoped, tag = 'input window, operand 1, single buffered']
    #allocation6 [shape = 's32[1]{0}', space=sflag, size = 0x4, scoped, tag = 'scoped memory for tpu_custom_call.1']
    #allocation7 [shape = 'u8[4096]{0}', space=vmem, size = 0x1000, scoped, tag = 'output window, operand 0, single buffered']
    %8 = vsyncpa [#allocation3], 0
    %9 = vsyncpa [#allocation6], 0
    %10 = vsyncpa [#allocation4], 0
    // Predicated region
    $region2: #{tpu_custom_call.1} parent=1 // pred_check
      _
    $region3: #{tpu_custom_call.1} parent=1 // pred_check_branch
      %12 = sbr.rel (0) target = $region5
    $region4: #{tpu_custom_call.1} parent=1 // pred_region
      %s14 = ssub.s32 128, 128
      %15 = vsyncadd [#allocation3], %s14
      %s17 = sshll.u32 [#allocation2], 4
      %s18 = int_to_ptr.vmem [resolvable:$true] %s17
      %20 = dma.hbm_to_vmem [thread:$0]  %s0, 128, %s18, [#allocation3]
    $region5: #{tpu_custom_call.1} parent=1 // pred_fallthru
      _
    // Predicated region
    $region6: #{tpu_custom_call.1} parent=1 // pred_check
      _
    $region7: #{tpu_custom_call.1} parent=1 // pred_check_branch
      %22 = sbr.rel (0) target = $region9
    $region8: #{tpu_custom_call.1} parent=1 // pred_region
      %s24 = ssub.s32 6144, 6144
      %25 = vsyncadd [#allocation6], %s24
      %s26 = sshll.u32 [#allocation5], 4
      %s27 = int_to_ptr.vmem [resolvable:$true] %s26
      %32 = dma.hbm_to_vmem [thread:$0]  %s1, 6144, %s27, [#allocation6], 384, 384, 24
    $region9: #{tpu_custom_call.1} parent=1 // pred_fallthru
      _
    // Predicated region
    $region10: #{tpu_custom_call.1} parent=1 // pred_check
      _
    $region11: #{tpu_custom_call.1} parent=1 // pred_check_branch
      %34 = sbr.rel (0) target = $region13
    $region12: #{tpu_custom_call.1} parent=1 // pred_region
      _
    $region13: #{tpu_custom_call.1} parent=1 // pred_fallthru
      _
    // Predicated region
    $region14: #{tpu_custom_call.1} parent=1 // pred_check
      _
    $region15: #{tpu_custom_call.1} parent=1 // pred_check_branch
      %36 = sbr.rel (0) target = $region17
    $region16: #{tpu_custom_call.1} parent=1 // pred_region
      %37 = dma.done [#allocation3], 128
    $region17: #{tpu_custom_call.1} parent=1 // pred_fallthru
      _
    // Predicated region
    $region18: #{tpu_custom_call.1} parent=1 // pred_check
      _
    $region19: #{tpu_custom_call.1} parent=1 // pred_check_branch
      %39 = sbr.rel (0) target = $region21
    $region20: #{tpu_custom_call.1} parent=1 // pred_region
      %40 = dma.done [#allocation6], 6144
    $region21: #{tpu_custom_call.1} parent=1 // pred_fallthru
      _
    %v41 = vld [vmem:[#allocation2] sm:$0xff]
    %v42 = vld [vmem:[#allocation5] sm:$0xff]
    %v43 = vld [vmem:[#allocation5 + $0x8] sm:$0xff]
    %v44 = vld [vmem:[#allocation5 + $0x10] sm:$0xff]
    %v45 = vld [vmem:[#allocation5 + $0x18] sm:$0xff]
    %v46 = vld [vmem:[#allocation5 + $0x20] sm:$0xff]
    %v47 = vld [vmem:[#allocation5 + $0x28] sm:$0xff]
    %v48 = vld [vmem:[#allocation5 + $0x30] sm:$0xff]
    %v49 = vld [vmem:[#allocation5 + $0x38] sm:$0xff]
    %v50 = vld [vmem:[#allocation5 + $0x40] sm:$0xff]
    %v51 = vld [vmem:[#allocation5 + $0x48] sm:$0xff]
    %v52 = vld [vmem:[#allocation5 + $0x50] sm:$0xff]
    %v53 = vld [vmem:[#allocation5 + $0x58] sm:$0xff]
    %v54 = vld [vmem:[#allocation5 + $0x60] sm:$0xff]
    %v55 = vld [vmem:[#allocation5 + $0x68] sm:$0xff]
    %v56 = vld [vmem:[#allocation5 + $0x70] sm:$0xff]
    %v57 = vld [vmem:[#allocation5 + $0x78] sm:$0xff]
    %v58 = vld [vmem:[#allocation5 + $0x80] sm:$0xff]
    %v59 = vld [vmem:[#allocation5 + $0x88] sm:$0xff]
    %v60 = vld [vmem:[#allocation5 + $0x90] sm:$0xff]
    %v61 = vld [vmem:[#allocation5 + $0x98] sm:$0xff]
    %v62 = vld [vmem:[#allocation5 + $0xa0] sm:$0xff]
    %v63 = vld [vmem:[#allocation5 + $0xa8] sm:$0xff]
    %v64 = vld [vmem:[#allocation5 + $0xb0] sm:$0xff]
    %v65 = vld [vmem:[#allocation5 + $0xb8] sm:$0xff]
    %v66 = vld [vmem:[#allocation5 + $0xc0] sm:$0xff]
    %v67 = vld [vmem:[#allocation5 + $0xc8] sm:$0xff]
    %v68 = vld [vmem:[#allocation5 + $0xd0] sm:$0xff]
    %v69 = vld [vmem:[#allocation5 + $0xd8] sm:$0xff]
    %v70 = vld [vmem:[#allocation5 + $0xe0] sm:$0xff]
    %v71 = vld [vmem:[#allocation5 + $0xe8] sm:$0xff]
    %v72 = vld [vmem:[#allocation5 + $0xf0] sm:$0xff]
    %v73 = vld [vmem:[#allocation5 + $0xf8] sm:$0xff]
    %v74 = vld [vmem:[#allocation5 + $0x100] sm:$0xff]
    %v75 = vld [vmem:[#allocation5 + $0x108] sm:$0xff]
    %v76 = vld [vmem:[#allocation5 + $0x110] sm:$0xff]
    %v77 = vld [vmem:[#allocation5 + $0x118] sm:$0xff]
    %v78 = vld [vmem:[#allocation5 + $0x120] sm:$0xff]
    %v79 = vld [vmem:[#allocation5 + $0x128] sm:$0xff]
    %v80 = vld [vmem:[#allocation5 + $0x130] sm:$0xff]
    %v81 = vld [vmem:[#allocation5 + $0x138] sm:$0xff]
    %v82 = vld [vmem:[#allocation5 + $0x140] sm:$0xff]
    %v83 = vld [vmem:[#allocation5 + $0x148] sm:$0xff]
    %v84 = vld [vmem:[#allocation5 + $0x150] sm:$0xff]
    %v85 = vld [vmem:[#allocation5 + $0x158] sm:$0xff]
    %v86 = vld [vmem:[#allocation5 + $0x160] sm:$0xff]
    %v87 = vld [vmem:[#allocation5 + $0x168] sm:$0xff]
    %v88 = vld [vmem:[#allocation5 + $0x170] sm:$0xff]
    %v89 = vld [vmem:[#allocation5 + $0x178] sm:$0xff]
    %v90 = vld [vmem:[%s2] sm:$0x7]
    %v92 = vlaneseq
    %v93 = vshrl.u32 %v92, 7
    %v94 = vsub.s32 0, %v93
    %v95 = vrot.slane %v90, %v94
    %v96 = vlaneseq
    %v97 = vshrl.u32 %v96, 7
    %v98 = vsub.s32 1, %v97
    %v99 = vrot.slane %v90, %v98
    %v100 = vlaneseq
    %v101 = vshrl.u32 %v100, 7
    %v102 = vsub.s32 2, %v101
    %v103 = vrot.slane %v90, %v102
    %107 = vmatprep.subr.mxu0 %v43
    %108 = vmatpush1.msra.mxu0 %v42
    %109 = vmatprep.subr.mxu0 %v46
    %110 = vmatpush1.msra.mxu0 %v45
    %111 = vmatprep.subr.mxu0 %v49
    %112 = vmatpush1.msra.mxu0 %v48
    %113 = vmatprep.subr.mxu0 %v52
    %114 = vmatpush1.msra.mxu0 %v51
    %115 = vmatprep.subr.mxu0 %v55
    %116 = vmatpush1.msra.mxu0 %v54
    %117 = vmatprep.subr.mxu0 %v58
    %118 = vmatpush1.msra.mxu0 %v57
    %119 = vmatprep.subr.mxu0 %v61
    %120 = vmatpush1.msra.mxu0 %v60
    %121 = vmatprep.subr.mxu0 %v64
    %122 = vmatpush1.msra.mxu0 %v63
    %123 = vmatprep.subr.mxu0 %v67
    %124 = vmatpush1.msra.mxu0 %v66
    %125 = vmatprep.subr.mxu0 %v70
    %126 = vmatpush1.msra.mxu0 %v69
    %127 = vmatprep.subr.mxu0 %v73
    %128 = vmatpush1.msra.mxu0 %v72
    %129 = vmatprep.subr.mxu0 %v76
    %130 = vmatpush1.msra.mxu0 %v75
    %131 = vmatprep.subr.mxu0 %v79
    %132 = vmatpush1.msra.mxu0 %v78
    %133 = vmatprep.subr.mxu0 %v82
    %134 = vmatpush1.msra.mxu0 %v81
    %135 = vmatprep.subr.mxu0 %v85
    %136 = vmatpush1.msra.mxu0 %v84
    %137 = vmatprep.subr.mxu0 %v88
    %138 = vmatpush1.msra.mxu0 %v87
    %139 = vmatprep.subr.mxu0 0.0
    %140 = vmatpush1.msra.mxu0 0.0
    %141 = vmatprep.subr.mxu0 0.0
    %142 = vmatpush1.msra.mxu0 0.0
    %143 = vmatprep.subr.mxu0 0.0
    %144 = vmatpush1.msra.mxu0 0.0
    %145 = vmatprep.subr.mxu0 0.0
    %146 = vmatpush1.msra.mxu0 0.0
    %147 = vmatprep.subr.mxu0 0.0
    %148 = vmatpush1.msra.mxu0 0.0
    %149 = vmatprep.subr.mxu0 0.0
    %150 = vmatpush1.msra.mxu0 0.0
    %151 = vmatprep.subr.mxu0 0.0
    %152 = vmatpush1.msra.mxu0 0.0
    %153 = vmatprep.subr.mxu0 0.0
    %154 = vmatpush1.msra.mxu0 0.0
    %155 = vmatprep.subr.mxu0 0.0
    %156 = vmatpush1.msra.mxu0 0.0
    %157 = vmatprep.subr.mxu0 0.0
    %158 = vmatpush1.msra.mxu0 0.0
    %159 = vmatprep.subr.mxu0 0.0
    %160 = vmatpush1.msra.mxu0 0.0
    %161 = vmatprep.subr.mxu0 0.0
    %162 = vmatpush1.msra.mxu0 0.0
    %163 = vmatprep.subr.mxu0 0.0
    %164 = vmatpush1.msra.mxu0 0.0
    %165 = vmatprep.subr.mxu0 0.0
    %166 = vmatpush1.msra.mxu0 0.0
    %167 = vmatprep.subr.mxu0 0.0
    %168 = vmatpush1.msra.mxu0 0.0
    %169 = vmatprep.subr.mxu0 0.0
    %170 = vmatpush1.msra.mxu0 0.0
    %171 = vmatprep.mubr.f32.mxu0 0.0
    %172 = vmatmul.mubr.f32.gmra.mrb[0].mxu0 %v41
    %v173 = vpop.f32.mrb[0].mxu0
    %v174 = vadd.f32 %v95, %v173
    %v175 = vpop.f32.mrb[0].mxu0
    %v176 = vadd.f32 %v99, %v175
    %177 = vdwg.mxu0
    %178 = vmatprep.subr.mxu0 0.0
    %179 = vmatpush1.msra.mxu0 %v44
    %180 = vmatprep.subr.mxu0 0.0
    %181 = vmatpush1.msra.mxu0 %v47
    %182 = vmatprep.subr.mxu0 0.0
    %183 = vmatpush1.msra.mxu0 %v50
    %184 = vmatprep.subr.mxu0 0.0
    %185 = vmatpush1.msra.mxu0 %v53
    %186 = vmatprep.subr.mxu0 0.0
    %187 = vmatpush1.msra.mxu0 %v56
    %188 = vmatprep.subr.mxu0 0.0
    %189 = vmatpush1.msra.mxu0 %v59
    %190 = vmatprep.subr.mxu0 0.0
    %191 = vmatpush1.msra.mxu0 %v62
    %192 = vmatprep.subr.mxu0 0.0
    %193 = vmatpush1.msra.mxu0 %v65
    %194 = vmatprep.subr.mxu0 0.0
    %195 = vmatpush1.msra.mxu0 %v68
    %196 = vmatprep.subr.mxu0 0.0
    %197 = vmatpush1.msra.mxu0 %v71
    %198 = vmatprep.subr.mxu0 0.0
    %199 = vmatpush1.msra.mxu0 %v74
    %200 = vmatprep.subr.mxu0 0.0
    %201 = vmatpush1.msra.mxu0 %v77
    %202 = vmatprep.subr.mxu0 0.0
    %203 = vmatpush1.msra.mxu0 %v80
    %204 = vmatprep.subr.mxu0 0.0
    %205 = vmatpush1.msra.mxu0 %v83
    %206 = vmatprep.subr.mxu0 0.0
    %207 = vmatpush1.msra.mxu0 %v86
    %208 = vmatprep.subr.mxu0 0.0
    %209 = vmatpush1.msra.mxu0 %v89
    %210 = vmatprep.subr.mxu0 0.0
    %211 = vmatpush1.msra.mxu0 0.0
    %212 = vmatprep.subr.mxu0 0.0
    %213 = vmatpush1.msra.mxu0 0.0
    %214 = vmatprep.subr.mxu0 0.0
    %215 = vmatpush1.msra.mxu0 0.0
    %216 = vmatprep.subr.mxu0 0.0
    %217 = vmatpush1.msra.mxu0 0.0
    %218 = vmatprep.subr.mxu0 0.0
    %219 = vmatpush1.msra.mxu0 0.0
    %220 = vmatprep.subr.mxu0 0.0
    %221 = vmatpush1.msra.mxu0 0.0
    %222 = vmatprep.subr.mxu0 0.0
    %223 = vmatpush1.msra.mxu0 0.0
    %224 = vmatprep.subr.mxu0 0.0
    %225 = vmatpush1.msra.mxu0 0.0
    %226 = vmatprep.subr.mxu0 0.0
    %227 = vmatpush1.msra.mxu0 0.0
    %228 = vmatprep.subr.mxu0 0.0
    %229 = vmatpush1.msra.mxu0 0.0
    %230 = vmatprep.subr.mxu0 0.0
    %231 = vmatpush1.msra.mxu0 0.0
    %232 = vmatprep.subr.mxu0 0.0
    %233 = vmatpush1.msra.mxu0 0.0
    %234 = vmatprep.subr.mxu0 0.0
    %235 = vmatpush1.msra.mxu0 0.0
    %236 = vmatprep.subr.mxu0 0.0
    %237 = vmatpush1.msra.mxu0 0.0
    %238 = vmatprep.subr.mxu0 0.0
    %239 = vmatpush1.msra.mxu0 0.0
    %240 = vmatprep.subr.mxu0 0.0
    %241 = vmatpush1.msra.mxu0 0.0
    %242 = vmatprep.mubr.f32.mxu0 0.0
    %243 = vmatmul.mubr.f32.gmra.mrb[0].mxu0 %v41
    %v244 = vpop.f32.mrb[0].mxu0
    %v245 = vadd.f32 %v103, %v244
    %v246 = vpop.f32.mrb[0].mxu0
    %247 = vdwg.mxu0
    %v248 = vxor.u32 %v245, 2147483648
    %v249 = vmul.f32 %v248, 1.442695
    %v250 = vpow.pop %v249
    %v251 = vadd.f32 %v250, 1.0
    %v252 = vrcp.pop %v251
    %v253 = vmul.f32 1.0, %v252
    %v254 = vsub.f32 %v174, %v176
    %v255 = vmul.f32 %v253, %v254
    %v256 = vadd.f32 %v176, %v255
    %257 = vst [vmem:[#allocation7] sm:$0xff] %v256
    // Predicated region
    $region22: #{tpu_custom_call.1} parent=1 // pred_check
      _
    $region23: #{tpu_custom_call.1} parent=1 // pred_check_branch
      %259 = sbr.rel (0) target = $region25
    $region24: #{tpu_custom_call.1} parent=1 // pred_region
      %s261 = ssub.s32 128, 128
      %262 = vsyncadd [#allocation4], %s261
      %s264 = sshll.u32 [#allocation7], 4
      %s265 = int_to_ptr.vmem [resolvable:$true] %s264
      %267 = dma.vmem_to_hbm [thread:$0]  %s265, 128, %s3, [#allocation4]
    $region25: #{tpu_custom_call.1} parent=1 // pred_fallthru
      _
    // Predicated region
    $region26: #{tpu_custom_call.1} parent=1 // pred_check
      _
    $region27: #{tpu_custom_call.1} parent=1 // pred_check_branch
      %269 = sbr.rel (0) target = $region29
    $region28: #{tpu_custom_call.1} parent=1 // pred_region
      %270 = dma.done [#allocation4], 128
    $region29: #{tpu_custom_call.1} parent=1 // pred_fallthru
      _
    %271 = vsyncpa [#allocation3], 1
    %272 = vsyncpa [#allocation6], 1
    %273 = vsyncpa [#allocation4], 1

</llo_original>
